<compile_context>
chip_gen: v7x
topology: tpu7x:2x2x1
jax: 0.10.0
libtpu: 0.0.40
codegen_flags: <defaults>
</compile_context>

<pallas_src>
import jax
import jax.numpy as jnp
from jax.experimental import pallas as pl
from jax.experimental.pallas import tpu as pltpu


def _round_up(x: int, m: int) -> int:
    return (x + m - 1) // m * m


def _patch_embed_kernel(p_ref, w_ref, b_ref, o_ref):
    # p_ref: (TILE_M, K) patches; w_ref: (K, E_pad) flattened conv weight
    # (stationary); b_ref: (1, E_pad) f32 bias (stationary).
    acc = jnp.dot(p_ref[...], w_ref[...], preferred_element_type=jnp.float32)
    o_ref[...] = (acc + b_ref[...]).astype(o_ref.dtype)


def patch_embed_forward(x, weight, bias, *, h, step, embed_dim,
                        compute_dtype=None, tile_m=1024):
    """Forward of PatchEmbed.

    x: (B, 1, H, W) NCHW (H must equal h).  weight: (E, 1, h, step).  bias: (E,).
    Returns (B, W // step, E) in x.dtype, matching
    Conv2d(1, E, kernel_size=(h, step), stride=step) + 'b e h w -> b (h w) e'.
    """
    B, C, H, W = x.shape
    assert C == 1, "in_channels must be 1"
    assert H == h, "image height must equal kernel height"
    assert W % step == 0, "Width of image must be divisible by step"

    out_dtype = x.dtype
    if compute_dtype is None:
        compute_dtype = x.dtype

    n_patches = W // step
    K = h * step
    M = B * n_patches
    E_pad = _round_up(embed_dim, 128)                       # lane-dense output
    tile_m_eff = max(8, min(_round_up(tile_m, 8), _round_up(M, 8)))
    M_pad = _round_up(M, tile_m_eff)

    # --- wrapper glue: patchify -------------------------------------------
    # Cast to the compute dtype *before* the transpose so this extra HBM pass
    # moves as few bytes as possible.
    # TODO(synk): the (h, n, step) -> (n, h, step) transpose is still a
    # wrapper-side XLA op (one extra HBM pass over the activation); fusing it
    # into the kernel DMA requires an in-kernel lane->sublane relayout that
    # Mosaic lowers poorly, so it is intentionally kept outside the kernel.
    xc = x[:, 0].astype(compute_dtype)                      # (B, h, W)
    patches = (
        xc.reshape(B, h, n_patches, step)
        .transpose(0, 2, 1, 3)
        .reshape(M, K)
    )
    if M_pad != M:
        patches = jnp.pad(patches, ((0, M_pad - M), (0, 0)))

    # Conv weight (E, 1, h, step): row-major flatten over (h, step) matches the
    # patch flattening order above.
    w_flat = weight.reshape(embed_dim, K).T.astype(compute_dtype)   # (K, E)
    b = bias.astype(jnp.float32).reshape(1, embed_dim)              # (1, E)
    if E_pad != embed_dim:
        w_flat = jnp.pad(w_flat, ((0, 0), (0, E_pad - embed_dim)))
        b = jnp.pad(b, ((0, 0), (0, E_pad - embed_dim)))

    # --- pallas_call ---------------------------------------------------------
    grid = (M_pad // tile_m_eff,)
    bpe_in = jnp.dtype(compute_dtype).itemsize
    bpe_out = jnp.dtype(out_dtype).itemsize
    tile_bytes = (tile_m_eff * K * bpe_in                 # patches tile
                  + K * E_pad * bpe_in                    # weight (stationary)
                  + E_pad * 4                             # bias  (stationary)
                  + tile_m_eff * E_pad * bpe_out)         # output tile
    # Double-buffered working set + headroom; within physical VMEM on v5e/v6e/v7x.
    vmem_limit = int(min(max(2 * tile_bytes + (4 << 20), 32 << 20), 48 << 20))

    cost = pl.CostEstimate(
        flops=2 * M_pad * K * E_pad,
        transcendentals=0,
        bytes_accessed=(M_pad * K * bpe_in + K * E_pad * bpe_in
                        + E_pad * 4 + M_pad * E_pad * bpe_out),
    )

    out = pl.pallas_call(
        _patch_embed_kernel,
        out_shape=jax.ShapeDtypeStruct((M_pad, E_pad), out_dtype),
        grid_spec=pltpu.PrefetchScalarGridSpec(
            num_scalar_prefetch=0,
            grid=grid,
            in_specs=[
                pl.BlockSpec((tile_m_eff, K), lambda i: (i, 0)),   # patches (tiled)
                pl.BlockSpec((K, E_pad), lambda i: (0, 0)),        # weight (stationary)
                pl.BlockSpec((1, E_pad), lambda i: (0, 0)),        # bias   (stationary)
            ],
            out_specs=pl.BlockSpec((tile_m_eff, E_pad), lambda i: (i, 0)),
        ),
        compiler_params=pltpu.CompilerParams(
            dimension_semantics=("parallel",),   # v7x: split row tiles across 2 TCs
            vmem_limit_bytes=vmem_limit,
        ),
        cost_estimate=cost,
    )(patches, w_flat, b)

    # Strip M / E padding, then (B*n, E) -> (B, n, E)  (== 'b e 1 w -> b w e').
    return out[:M, :embed_dim].reshape(B, n_patches, embed_dim)


def _reference_forward(x, weight, bias, *, h, step, embed_dim):
    """Pure-JAX reference of Conv2d((h, step), stride=step) + rearrange."""
    B, _, H, W = x.shape
    n = W // step
    patches = (
        x[:, 0].astype(jnp.float32)
        .reshape(B, h, n, step).transpose(0, 2, 1, 3).reshape(B, n, h * step)
    )
    w_flat = weight.astype(jnp.float32).reshape(embed_dim, h * step)
    return jnp.einsum("bnk,ek->bne", patches, w_flat) + bias[None, None, :]


if __name__ == "__main__":
    # Small shapes consistent with the module: H=h=16, W=16, step=4, E=32.
    B, h, W, step, embed_dim = 2, 16, 16, 4, 32

    key = jax.random.PRNGKey(0)
    kx, kw, kb = jax.random.split(key, 3)
    x = jax.random.normal(kx, (B, 1, h, W), dtype=jnp.float32)
    weight = jax.random.normal(kw, (embed_dim, 1, h, step), dtype=jnp.float32) * 0.02
    bias = jax.random.normal(kb, (embed_dim,), dtype=jnp.float32) * 0.02

    ref = _reference_forward(x, weight, bias, h=h, step=step, embed_dim=embed_dim)

    # f32 compute path.
    out = patch_embed_forward(x, weight, bias, h=h, step=step, embed_dim=embed_dim)
    out = jax.block_until_ready(out)
    assert out.shape == (B, W // step, embed_dim), out.shape
    assert jnp.allclose(out, ref, atol=1e-3, rtol=1e-3), "f32 mismatch vs reference"

    # bf16 compute path (halves HBM traffic; f32 accumulation on the MXU).
    out_bf16 = patch_embed_forward(
        x, weight, bias, h=h, step=step, embed_dim=embed_dim,
        compute_dtype=jnp.bfloat16)
    out_bf16 = jax.block_until_ready(out_bf16)
    assert jnp.allclose(out_bf16, ref, atol=1e-2, rtol=5e-2), "bf16 mismatch"

    # Wider image with a small tile to exercise the multi-step parallel grid.
    W2 = 256
    x2 = jax.random.normal(kx, (B, 1, h, W2), dtype=jnp.float32)
    ref2 = _reference_forward(x2, weight, bias, h=h, step=step, embed_dim=embed_dim)
    out2 = patch_embed_forward(
        x2, weight, bias, h=h, step=step, embed_dim=embed_dim, tile_m=32)
    out2 = jax.block_until_ready(out2)
    assert out2.shape == (B, W2 // step, embed_dim), out2.shape
    assert jnp.allclose(out2, ref2, atol=1e-3, rtol=1e-3), "multi-tile mismatch"

    print("KERNEL_OK")
</pallas_src>

<mosaic_0001>
module attributes {stable_mosaic.version = 11 : i64} {
  func.func @_patch_embed_kernel(%arg0: i32, %arg1: memref<8x64xf32, #tpu.memory_space<vmem>>, %arg2: memref<64x128xf32, #tpu.memory_space<vmem>>, %arg3: memref<1x128xf32, #tpu.memory_space<vmem>>, %arg4: memref<8x128xf32, #tpu.memory_space<vmem>>) attributes {dimension_semantics = [#tpu.dimension_semantics<parallel>], iteration_bounds = array<i64: 1>, scalar_prefetch = 0 : i64, scratch_operands = 0 : i64, tpu.core_type = #tpu.core_type<tc>, window_params = [{transform_indices = @transform_0, window_bounds = array<i64: 8, 64>}, {pipeline_mode = #tpu.pipeline_mode<synchronous>, transform_indices = @transform_1, window_bounds = array<i64: 64, 128>}, {pipeline_mode = #tpu.pipeline_mode<synchronous>, transform_indices = @transform_2, window_bounds = array<i64: 1, 128>}, {transform_indices = @transform_3, window_bounds = array<i64: 8, 128>}]} {
    %c0 = arith.constant 0 : index
    %c0_0 = arith.constant 0 : index
    %0 = vector.load %arg1[%c0, %c0_0] : memref<8x64xf32, #tpu.memory_space<vmem>>, vector<8x64xf32>
    %c0_1 = arith.constant 0 : index
    %c0_2 = arith.constant 0 : index
    %1 = vector.load %arg2[%c0_1, %c0_2] : memref<64x128xf32, #tpu.memory_space<vmem>>, vector<64x128xf32>
    %cst = arith.constant dense<0.000000e+00> : vector<8x128xf32>
    %2 = tpu.matmul %0, %1, %cst {dimension_numbers = #tpu.dot_dimension_numbers<[1], [0], [0], [1], [0, 0, 1, 1], [], []>} : vector<8x64xf32>, vector<64x128xf32>, vector<8x128xf32> -> vector<8x128xf32>
    %c0_3 = arith.constant 0 : index
    %c0_4 = arith.constant 0 : index
    %3 = vector.load %arg3[%c0_3, %c0_4] : memref<1x128xf32, #tpu.memory_space<vmem>>, vector<1x128xf32>
    %4 = vector.broadcast %3 : vector<1x128xf32> to vector<8x128xf32>
    %5 = arith.addf %2, %4 : vector<8x128xf32>
    %c0_5 = arith.constant 0 : index
    %c0_6 = arith.constant 0 : index
    %6 = vector.load %arg4[%c0_5, %c0_6] : memref<8x128xf32, #tpu.memory_space<vmem>>, vector<8x128xf32>
    tpu.vector_store %arg4[%c0_5, %c0_6], %5 {strides = array<i32>} : memref<8x128xf32, #tpu.memory_space<vmem>>, vector<8x128xf32>,
    return
  }
  func.func @transform_0(%arg0: i32) -> (i32, i32) {
    %c0_i32 = arith.constant 0 : i32
    %c0_i32_0 = arith.constant 0 : i32
    return %arg0, %c0_i32 : i32, i32
  }
  func.func @transform_1(%arg0: i32) -> (i32, i32) {
    %c0_i32 = arith.constant 0 : i32
    %c0_i32_0 = arith.constant 0 : i32
    %c0_i32_1 = arith.constant 0 : i32
    return %c0_i32, %c0_i32_0 : i32, i32
  }
  func.func @transform_2(%arg0: i32) -> (i32, i32) {
    %c0_i32 = arith.constant 0 : i32
    %c0_i32_0 = arith.constant 0 : i32
    %c0_i32_1 = arith.constant 0 : i32
    return %c0_i32, %c0_i32_0 : i32, i32
  }
  func.func @transform_3(%arg0: i32) -> (i32, i32) {
    %c0_i32 = arith.constant 0 : i32
    %c0_i32_0 = arith.constant 0 : i32
    return %arg0, %c0_i32 : i32, i32
  }
}

</mosaic_0001>

<llo_original>
// kernel: tpu_custom_call.1
$region0: #{tpu_custom_call.1}
  #allocation0 [shape = 'u32[]', space=smem, size = 0x4, offset = 0x4, fixed_abs, tag = 'smem constant byte address 0x4 - core index']
  #allocation1 [shape = 'u32[144,128]{1,0:T(1,128)}', space=vmem, size = 0x12000, scoped, tag = 'internal scratch']
  %s0 = inlined_call_operand.hbm [shape: f32[8,64], index: 0, kind: input, shape index: {}]
  %s1 = inlined_call_operand.hbm [shape: f32[64,128], index: 1, kind: input, shape index: {}]
  %s2 = inlined_call_operand.vmem [shape: f32[1,128], index: 2, kind: input, shape index: {}]
  %s3 = inlined_call_operand.hbm [shape: f32[8,128], index: 3, kind: output, shape index: {}]
  %s4 = sld [smem:[#allocation0]]
  $region30: #{tpu_custom_call.1} parent=0
    _
  %s6 = ssub.s32 1, %s4
  %s7 = scalar_select 0, %s6, %s4
  $region1: #{tpu_custom_call.1} parent=0
    #allocation2 [shape = 'u8[4096]{0}', space=vmem, size = 0x1000, scoped, tag = 'input window, operand 0, single buffered']
    #allocation3 [shape = 's32[1]{0}', space=sflag, size = 0x4, scoped, tag = 'scoped memory for tpu_custom_call.1']
    #allocation4 [shape = 's32[1]{0}', space=sflag, size = 0x4, scoped, tag = 'scoped memory for tpu_custom_call.1']
    #allocation5 [shape = 'u8[32768]{0}', space=vmem, size = 0x8000, scoped, tag = 'input window, operand 1, single buffered']
    #allocation6 [shape = 's32[1]{0}', space=sflag, size = 0x4, scoped, tag = 'scoped memory for tpu_custom_call.1']
    #allocation7 [shape = 'u8[4096]{0}', space=vmem, size = 0x1000, scoped, tag = 'output window, operand 0, single buffered']
    %8 = vsyncpa [#allocation3], 0
    %9 = vsyncpa [#allocation6], 0
    %10 = vsyncpa [#allocation4], 0
    // Predicated region
    $region2: #{tpu_custom_call.1} parent=1 // pred_check
      _
    $region3: #{tpu_custom_call.1} parent=1 // pred_check_branch
      %12 = sbr.rel (0) target = $region5
    $region4: #{tpu_custom_call.1} parent=1 // pred_region
      %s14 = ssub.s32 128, 128
      %15 = vsyncadd [#allocation3], %s14
      %s17 = sshll.u32 [#allocation2], 4
      %s18 = int_to_ptr.vmem [resolvable:$true] %s17
      %20 = dma.hbm_to_vmem [thread:$0]  %s0, 128, %s18, [#allocation3]
    $region5: #{tpu_custom_call.1} parent=1 // pred_fallthru
      _
    // Predicated region
    $region6: #{tpu_custom_call.1} parent=1 // pred_check
      _
    $region7: #{tpu_custom_call.1} parent=1 // pred_check_branch
      %22 = sbr.rel (0) target = $region9
    $region8: #{tpu_custom_call.1} parent=1 // pred_region
      %s24 = ssub.s32 1024, 1024
      %25 = vsyncadd [#allocation6], %s24
      %s26 = sshll.u32 [#allocation5], 4
      %s27 = int_to_ptr.vmem [resolvable:$true] %s26
      %32 = dma.hbm_to_vmem [thread:$0]  %s1, 1024, %s27, [#allocation6], 128, 128, 8
    $region9: #{tpu_custom_call.1} parent=1 // pred_fallthru
      _
    // Predicated region
    $region10: #{tpu_custom_call.1} parent=1 // pred_check
      _
    $region11: #{tpu_custom_call.1} parent=1 // pred_check_branch
      %34 = sbr.rel (0) target = $region13
    $region12: #{tpu_custom_call.1} parent=1 // pred_region
      _
    $region13: #{tpu_custom_call.1} parent=1 // pred_fallthru
      _
    // Predicated region
    $region14: #{tpu_custom_call.1} parent=1 // pred_check
      _
    $region15: #{tpu_custom_call.1} parent=1 // pred_check_branch
      %36 = sbr.rel (0) target = $region17
    $region16: #{tpu_custom_call.1} parent=1 // pred_region
      %37 = dma.done [#allocation3], 128
    $region17: #{tpu_custom_call.1} parent=1 // pred_fallthru
      _
    // Predicated region
    $region18: #{tpu_custom_call.1} parent=1 // pred_check
      _
    $region19: #{tpu_custom_call.1} parent=1 // pred_check_branch
      %39 = sbr.rel (0) target = $region21
    $region20: #{tpu_custom_call.1} parent=1 // pred_region
      %40 = dma.done [#allocation6], 1024
    $region21: #{tpu_custom_call.1} parent=1 // pred_fallthru
      _
    %v41 = vld [vmem:[#allocation2] sm:$0xff]
    %v42 = vld [vmem:[#allocation5] sm:$0xff]
    %v43 = vld [vmem:[#allocation5 + $0x8] sm:$0xff]
    %v44 = vld [vmem:[#allocation5 + $0x10] sm:$0xff]
    %v45 = vld [vmem:[#allocation5 + $0x18] sm:$0xff]
    %v46 = vld [vmem:[#allocation5 + $0x20] sm:$0xff]
    %v47 = vld [vmem:[#allocation5 + $0x28] sm:$0xff]
    %v48 = vld [vmem:[#allocation5 + $0x30] sm:$0xff]
    %v49 = vld [vmem:[#allocation5 + $0x38] sm:$0xff]
    %v50 = vld [vmem:[%s2] sm:$0x1]
    %v52 = vlaneseq
    %v53 = vshrl.u32 %v52, 7
    %v54 = vsub.s32 0, %v53
    %v55 = vrot.slane %v50, %v54
    %vm57 = vcmask 523264
    %v59 = vsel %vm57, %v41, 0
    %61 = vmatprep.subr.mxu0 0.0
    %62 = vmatpush1.msra.mxu0 %v42
    %63 = vmatprep.subr.mxu0 0.0
    %64 = vmatpush1.msra.mxu0 %v43
    %65 = vmatprep.subr.mxu0 0.0
    %66 = vmatpush1.msra.mxu0 %v44
    %67 = vmatprep.subr.mxu0 0.0
    %68 = vmatpush1.msra.mxu0 %v45
    %69 = vmatprep.subr.mxu0 0.0
    %70 = vmatpush1.msra.mxu0 %v46
    %71 = vmatprep.subr.mxu0 0.0
    %72 = vmatpush1.msra.mxu0 %v47
    %73 = vmatprep.subr.mxu0 0.0
    %74 = vmatpush1.msra.mxu0 %v48
    %75 = vmatprep.subr.mxu0 0.0
    %76 = vmatpush1.msra.mxu0 %v49
    %77 = vmatprep.subr.mxu0 0.0
    %78 = vmatpush1.msra.mxu0 0.0
    %79 = vmatprep.subr.mxu0 0.0
    %80 = vmatpush1.msra.mxu0 0.0
    %81 = vmatprep.subr.mxu0 0.0
    %82 = vmatpush1.msra.mxu0 0.0
    %83 = vmatprep.subr.mxu0 0.0
    %84 = vmatpush1.msra.mxu0 0.0
    %85 = vmatprep.subr.mxu0 0.0
    %86 = vmatpush1.msra.mxu0 0.0
    %87 = vmatprep.subr.mxu0 0.0
    %88 = vmatpush1.msra.mxu0 0.0
    %89 = vmatprep.subr.mxu0 0.0
    %90 = vmatpush1.msra.mxu0 0.0
    %91 = vmatprep.subr.mxu0 0.0
    %92 = vmatpush1.msra.mxu0 0.0
    %93 = vmatprep.subr.mxu0 0.0
    %94 = vmatpush1.msra.mxu0 0.0
    %95 = vmatprep.subr.mxu0 0.0
    %96 = vmatpush1.msra.mxu0 0.0
    %97 = vmatprep.subr.mxu0 0.0
    %98 = vmatpush1.msra.mxu0 0.0
    %99 = vmatprep.subr.mxu0 0.0
    %100 = vmatpush1.msra.mxu0 0.0
    %101 = vmatprep.subr.mxu0 0.0
    %102 = vmatpush1.msra.mxu0 0.0
    %103 = vmatprep.subr.mxu0 0.0
    %104 = vmatpush1.msra.mxu0 0.0
    %105 = vmatprep.subr.mxu0 0.0
    %106 = vmatpush1.msra.mxu0 0.0
    %107 = vmatprep.subr.mxu0 0.0
    %108 = vmatpush1.msra.mxu0 0.0
    %109 = vmatprep.subr.mxu0 0.0
    %110 = vmatpush1.msra.mxu0 0.0
    %111 = vmatprep.subr.mxu0 0.0
    %112 = vmatpush1.msra.mxu0 0.0
    %113 = vmatprep.subr.mxu0 0.0
    %114 = vmatpush1.msra.mxu0 0.0
    %115 = vmatprep.subr.mxu0 0.0
    %116 = vmatpush1.msra.mxu0 0.0
    %117 = vmatprep.subr.mxu0 0.0
    %118 = vmatpush1.msra.mxu0 0.0
    %119 = vmatprep.subr.mxu0 0.0
    %120 = vmatpush1.msra.mxu0 0.0
    %121 = vmatprep.subr.mxu0 0.0
    %122 = vmatpush1.msra.mxu0 0.0
    %123 = vmatprep.subr.mxu0 0.0
    %124 = vmatpush1.msra.mxu0 0.0
    %125 = vmatprep.mubr.f32.mxu0 0.0
    %126 = vmatmul.mubr.f32.gmra.mrb[0].mxu0 %v59
    %v127 = vpop.f32.mrb[0].mxu0
    %v128 = vadd.f32 %v55, %v127
    %v129 = vpop.f32.mrb[0].mxu0
    %130 = vdwg.mxu0
    %131 = vst [vmem:[#allocation7] sm:$0xff] %v128
    // Predicated region
    $region22: #{tpu_custom_call.1} parent=1 // pred_check
      _
    $region23: #{tpu_custom_call.1} parent=1 // pred_check_branch
      %133 = sbr.rel (0) target = $region25
    $region24: #{tpu_custom_call.1} parent=1 // pred_region
      %s135 = ssub.s32 128, 128
      %136 = vsyncadd [#allocation4], %s135
      %s138 = sshll.u32 [#allocation7], 4
      %s139 = int_to_ptr.vmem [resolvable:$true] %s138
      %141 = dma.vmem_to_hbm [thread:$0]  %s139, 128, %s3, [#allocation4]
    $region25: #{tpu_custom_call.1} parent=1 // pred_fallthru
      _
    // Predicated region
    $region26: #{tpu_custom_call.1} parent=1 // pred_check
      _
    $region27: #{tpu_custom_call.1} parent=1 // pred_check_branch
      %143 = sbr.rel (0) target = $region29
    $region28: #{tpu_custom_call.1} parent=1 // pred_region
      %144 = dma.done [#allocation4], 128
    $region29: #{tpu_custom_call.1} parent=1 // pred_fallthru
      _
    %145 = vsyncpa [#allocation3], 1
    %146 = vsyncpa [#allocation6], 1
    %147 = vsyncpa [#allocation4], 1

</llo_original>
